<compile_context>
chip_gen: v7x
topology: tpu7x:2x2x1
jax: 0.10.0
libtpu: 0.0.40
codegen_flags: <defaults>
</compile_context>

<pallas_src>
import functools
import math

import jax
import jax.numpy as jnp
from jax.experimental import pallas as pl
from jax.experimental.pallas import tpu as pltpu

NEG_INF = -1e30  # finite mask value -> no inf-inf NaN in fully masked tiles


# --------------------- Stage 1: RMSNorm1 + QKV projection ---------------------
def _rmsnorm_qkv_kernel(x_ref, wqkv_ref, g1_ref, qkv_ref, *, eps):
    x = x_ref[...].astype(jnp.float32)                                 # (TR, D)
    ms = jnp.mean(x * x, axis=-1, keepdims=True)
    h = x * jax.lax.rsqrt(ms + eps) * g1_ref[...]                      # f32 elementwise
    qkv_ref[...] = jax.lax.dot_general(                                # (TR, 3D), bf16 x bf16 -> f32
        h.astype(jnp.bfloat16), wqkv_ref[...],
        dimension_numbers=(((1,), (1,)), ((), ())),                    # contract D with D (no .T)
        preferred_element_type=jnp.float32).astype(qkv_ref.dtype)


# ----------- Stage 2: causal flash attention with head-indexed RoPE -----------
def _flash_attn_kernel(q_ref, k_ref, v_ref, cos_ref, sin_ref, o_ref,
                       m_sc, l_sc, acc_sc, *, scale, q_tile, kv_tile, d_k):
    qi = pl.program_id(1)
    ki = pl.program_id(2)

    @pl.when(ki == 0)
    def _init():
        m_sc[...] = jnp.full(m_sc.shape, NEG_INF, jnp.float32)
        l_sc[...] = jnp.zeros(l_sc.shape, jnp.float32)
        acc_sc[...] = jnp.zeros(acc_sc.shape, jnp.float32)

    # skip kv tiles that lie entirely in the causally-masked future
    @pl.when(ki * kv_tile <= qi * q_tile + (q_tile - 1))
    def _compute():
        cos = cos_ref[0]                                               # (1, d_k)  per-head table
        sin = sin_ref[0]                                               # (1, d_k)  [sin, -sin]
        half = d_k // 2

        def rope(t):  # t*[cos,cos] + rotate_half(t)*[sin,-sin]  (concat proven; pltpu.roll optional)
            t_swap = jnp.concatenate([t[:, half:], t[:, :half]], axis=-1)
            return t * cos + t_swap * sin

        q = rope(q_ref[0].astype(jnp.float32)).astype(jnp.bfloat16)    # (tq, dk)
        k = rope(k_ref[0].astype(jnp.float32)).astype(jnp.bfloat16)    # (tk, dk)

        s = jax.lax.dot_general(                                       # (tq, tk) f32
            q, k, dimension_numbers=(((1,), (1,)), ((), ())),
            preferred_element_type=jnp.float32) * scale

        row = qi * q_tile + jax.lax.broadcasted_iota(jnp.int32, (q_tile, kv_tile), 0)
        col = ki * kv_tile + jax.lax.broadcasted_iota(jnp.int32, (q_tile, kv_tile), 1)
        s = jnp.where(col <= row, s, NEG_INF)

        m_prev = m_sc[...]
        m_new = jnp.maximum(m_prev, jnp.max(s, axis=-1, keepdims=True))
        alpha = jnp.exp(m_prev - m_new)
        p = jnp.exp(s - m_new)                                         # f32
        l_sc[...] = alpha * l_sc[...] + jnp.sum(p, axis=-1, keepdims=True)
        pv = jax.lax.dot_general(                                      # (tq, dk), bf16 p@V
            p.astype(jnp.bfloat16), v_ref[0].astype(jnp.bfloat16),
            dimension_numbers=(((1,), (0,)), ((), ())),
            preferred_element_type=jnp.float32)
        acc_sc[...] = alpha * acc_sc[...] + pv
        m_sc[...] = m_new

    @pl.when(ki == pl.num_programs(2) - 1)
    def _finalize():
        inv_l = pl.reciprocal(l_sc[...], approx=True)
        o_ref[0] = (acc_sc[...] * inv_l).astype(o_ref.dtype)


# --- Stage 3: W_o + residual + RMSNorm2 + d_ff-chunked FFN + residual ---
def _wo_ffn_kernel(x_ref, attn_ref, wo_ref, g2_ref, w1_ref, w2t_ref, o_ref,
                   h2_sc, acc_sc, *, eps):
    ci = pl.program_id(1)

    @pl.when(ci == 0)
    def _proj_and_norm():
        attn_p = jax.lax.dot_general(                                  # (TR, D) f32
            attn_ref[...].astype(jnp.bfloat16), wo_ref[...],
            dimension_numbers=(((1,), (1,)), ((), ())),
            preferred_element_type=jnp.float32)
        y = x_ref[...].astype(jnp.float32) + attn_p                    # residual 1 (dropout = id)
        ms = jnp.mean(y * y, axis=-1, keepdims=True)
        h2_sc[...] = (y * jax.lax.rsqrt(ms + eps) * g2_ref[...]).astype(jnp.bfloat16)
        acc_sc[...] = y

    # one d_ff chunk: f = silu(h2 @ W1_c^T); acc += f @ W2_c
    f = jax.lax.dot_general(
        h2_sc[...], w1_ref[...],
        dimension_numbers=(((1,), (1,)), ((), ())),
        preferred_element_type=jnp.float32)                            # (TR, dff_tile) f32
    f = f * jax.nn.sigmoid(f)                                          # SiLU in f32
    acc_sc[...] += jax.lax.dot_general(
        f.astype(jnp.bfloat16), w2t_ref[...],
        dimension_numbers=(((1,), (0,)), ((), ())),
        preferred_element_type=jnp.float32)                            # (TR, D)

    @pl.when(ci == pl.num_programs(1) - 1)
    def _write():
        o_ref[...] = acc_sc[...].astype(o_ref.dtype)                   # residual 2 already in acc


# --------------------------------- wrapper ---------------------------------
def transformer_block(x, params, *, n_heads, row_tile=8, q_tile=8, kv_tile=8, dff_tile=32):
    B, T, D = x.shape
    d_k = D // n_heads
    d_ff = params["w1"].shape[0]
    BT, BH = B * T, B * n_heads
    eps = float(jnp.finfo(jnp.float32).eps)            # nn.RMSNorm(eps=None)
    scale = 1.0 / math.sqrt(d_k)

    row_tile = min(row_tile, BT)
    q_tile = min(q_tile, T)
    kv_tile = min(kv_tile, T)
    dff_tile = min(dff_tile, d_ff)
    assert BT % row_tile == 0 and T % q_tile == 0 and T % kv_tile == 0 and d_ff % dff_tile == 0

    # bf16 weight copies for the MXU (halves weight DMA, no per-step cast); W2 pre-transposed
    # once in the wrapper so d_ff chunking keeps D as the lane-dense minor dim.
    wqkv = params["wqkv"].astype(jnp.bfloat16)         # (3D, D)
    wo = params["wo"].astype(jnp.bfloat16)             # (D, D)
    w1 = params["w1"].astype(jnp.bfloat16)             # (d_ff, D)
    w2t = params["w2"].T.astype(jnp.bfloat16)          # (d_ff, D)
    g1, g2 = params["g1"], params["g2"]                # (1, D) f32

    x_rows = x.reshape(BT, D)

    # ---------------- Stage 1: RMSNorm1 + QKV ----------------
    qkv_rows = pl.pallas_call(
        functools.partial(_rmsnorm_qkv_kernel, eps=eps),
        out_shape=jax.ShapeDtypeStruct((BT, 3 * D), jnp.float32),
        grid=(BT // row_tile,),
        in_specs=[
            pl.BlockSpec((row_tile, D), lambda r: (r, 0)),
            pl.BlockSpec((3 * D, D), lambda r: (0, 0)),
            pl.BlockSpec((1, D), lambda r: (0, 0)),
        ],
        out_specs=pl.BlockSpec((row_tile, 3 * D), lambda r: (r, 0)),
        compiler_params=pltpu.CompilerParams(dimension_semantics=("parallel",)),
        cost_estimate=pl.CostEstimate(
            flops=2 * BT * D * 3 * D,
            transcendentals=BT,
            bytes_accessed=4 * BT * D + 2 * 3 * D * D + 4 * D + 4 * BT * 3 * D),
    )(x_rows, wqkv, g1)

    # wrapper-side layout plumbing (plain XLA, not in-kernel): split heads
    qkv5 = qkv_rows.reshape(B, T, 3, n_heads, d_k).transpose(2, 0, 3, 1, 4)  # (3,B,H,T,dk)
    q = qkv5[0].reshape(BH, T, d_k)
    k = qkv5[1].reshape(BH, T, d_k)
    v = qkv5[2].reshape(BH, T, d_k)

    # head-indexed rotary tables (the module's quirk), one row per (batch, head)
    cos_bh = jnp.tile(params["cos"], (B, 1)).reshape(BH, 1, d_k)
    sin_bh = jnp.tile(params["sin"], (B, 1)).reshape(BH, 1, d_k)

    # ---------------- Stage 2: flash attention ----------------
    attn = pl.pallas_call(
        functools.partial(_flash_attn_kernel, scale=scale,
                          q_tile=q_tile, kv_tile=kv_tile, d_k=d_k),
        out_shape=jax.ShapeDtypeStruct((BH, T, d_k), jnp.float32),
        grid=(BH, T // q_tile, T // kv_tile),
        in_specs=[
            pl.BlockSpec((1, q_tile, d_k), lambda b, qi, ki: (b, qi, 0)),
            pl.BlockSpec((1, kv_tile, d_k), lambda b, qi, ki: (b, ki, 0)),
            pl.BlockSpec((1, kv_tile, d_k), lambda b, qi, ki: (b, ki, 0)),
            pl.BlockSpec((1, 1, d_k), lambda b, qi, ki: (b, 0, 0)),
            pl.BlockSpec((1, 1, d_k), lambda b, qi, ki: (b, 0, 0)),
        ],
        out_specs=pl.BlockSpec((1, q_tile, d_k), lambda b, qi, ki: (b, qi, 0)),
        scratch_shapes=[pltpu.VMEM((q_tile, 1), jnp.float32),     # m
                        pltpu.VMEM((q_tile, 1), jnp.float32),     # l
                        pltpu.VMEM((q_tile, d_k), jnp.float32)],  # acc
        compiler_params=pltpu.CompilerParams(
            dimension_semantics=("parallel", "parallel", "arbitrary")),
        cost_estimate=pl.CostEstimate(
            flops=4 * BH * T * T * d_k,
            transcendentals=BH * T * T,
            bytes_accessed=4 * (4 * BH * T * d_k)),
    )(q, k, v, cos_bh, sin_bh)

    attn_rows = attn.reshape(B, n_heads, T, d_k).transpose(0, 2, 1, 3).reshape(BT, D)

    # ---------------- Stage 3: W_o + residual + RMSNorm2 + FFN + residual ----------------
    out_rows = pl.pallas_call(
        functools.partial(_wo_ffn_kernel, eps=eps),
        out_shape=jax.ShapeDtypeStruct((BT, D), x.dtype),
        grid=(BT // row_tile, d_ff // dff_tile),
        in_specs=[
            pl.BlockSpec((row_tile, D), lambda r, c: (r, 0)),    # x rows
            pl.BlockSpec((row_tile, D), lambda r, c: (r, 0)),    # attn rows
            pl.BlockSpec((D, D), lambda r, c: (0, 0)),           # W_o
            pl.BlockSpec((1, D), lambda r, c: (0, 0)),           # gamma2
            pl.BlockSpec((dff_tile, D), lambda r, c: (c, 0)),    # W1 chunk
            pl.BlockSpec((dff_tile, D), lambda r, c: (c, 0)),    # W2^T chunk
        ],
        out_specs=pl.BlockSpec((row_tile, D), lambda r, c: (r, 0)),
        scratch_shapes=[pltpu.VMEM((row_tile, D), jnp.bfloat16),  # h2 (FFN input)
                        pltpu.VMEM((row_tile, D), jnp.float32)],  # residual accumulator
        compiler_params=pltpu.CompilerParams(
            dimension_semantics=("parallel", "arbitrary")),
        cost_estimate=pl.CostEstimate(
            flops=2 * BT * D * D + 4 * BT * D * d_ff,
            transcendentals=BT * d_ff + BT,
            bytes_accessed=4 * 3 * BT * D + 2 * (D * D + 2 * d_ff * D)),
    )(x_rows, attn_rows, wo, g2, w1, w2t)

    return out_rows.reshape(B, T, D)


# ------------------------- pure-JAX f32 reference -------------------------
def reference_block(x, params, *, n_heads):
    B, T, D = x.shape
    d_k = D // n_heads
    eps = float(jnp.finfo(jnp.float32).eps)
    scale = 1.0 / math.sqrt(d_k)

    def rmsnorm(v, g):
        return v * jax.lax.rsqrt(jnp.mean(v * v, axis=-1, keepdims=True) + eps) * g

    h = rmsnorm(x, params["g1"])
    qkv = h @ params["wqkv"].T                                   # (B, T, 3D)
    qkv = qkv.reshape(B, T, 3, n_heads, d_k).transpose(2, 0, 3, 1, 4)
    Q, K, V = qkv[0], qkv[1], qkv[2]                             # (B, H, T, dk)

    cosf = params["cos"][None, :, None, :]                       # (1, H, 1, dk) per-head quirk
    sinf = params["sin"][None, :, None, :]

    def rope(t):
        half = d_k // 2
        t_swap = jnp.concatenate([t[..., half:], t[..., :half]], axis=-1)
        return t * cosf + t_swap * sinf

    Q, K = rope(Q), rope(K)
    scores = jnp.einsum("bhqd,bhkd->bhqk", Q, K) * scale
    mask = jnp.tril(jnp.ones((T, T), dtype=bool))
    scores = jnp.where(mask, scores, -jnp.inf)
    p = jax.nn.softmax(scores, axis=-1)
    attn = jnp.einsum("bhqk,bhkd->bhqd", p, V)
    attn = attn.transpose(0, 2, 1, 3).reshape(B, T, D) @ params["wo"].T
    x = x + attn

    h2 = rmsnorm(x, params["g2"])
    f = h2 @ params["w1"].T
    f = f * jax.nn.sigmoid(f)
    x = x + f @ params["w2"].T
    return x


if __name__ == "__main__":
    # small shapes consistent with the module (T=16 exercises multi-tile flash + causal skip)
    B, T, D, H, DFF = 2, 16, 32, 4, 64
    DK = D // H
    MAX_SEQ = T

    key = jax.random.PRNGKey(0)
    ks = jax.random.split(key, 8)
    x = jax.random.normal(ks[0], (B, T, D), jnp.float32)

    wqkv = 0.02 * jax.random.normal(ks[1], (3 * D, D), jnp.float32)
    wo = 0.02 * jax.random.normal(ks[2], (D, D), jnp.float32)
    w1 = 0.02 * jax.random.normal(ks[3], (DFF, D), jnp.float32)
    w2 = 0.02 * jax.random.normal(ks[4], (D, DFF), jnp.float32)
    g1 = 1.0 + 0.1 * jax.random.normal(ks[5], (1, D), jnp.float32)
    g2 = 1.0 + 0.1 * jax.random.normal(ks[6], (1, D), jnp.float32)

    # Rotary buffers, reproducing the PyTorch Rotary exactly (theta indexed by head index).
    angular_freq = (1.0 / 10000.0) ** jnp.linspace(0.0, 1.0, DK // 4)
    angular_freq = jnp.concatenate([angular_freq, jnp.zeros(DK // 4)])   # (dk//2,)
    t = jnp.arange(MAX_SEQ, dtype=jnp.float32)
    theta = jnp.einsum("i,j->ij", t, angular_freq)                       # (max_seq, dk//2)
    cos = jnp.cos(theta)[:H]                                             # (H, dk//2)
    sin = jnp.sin(theta)[:H]
    cos_full = jnp.concatenate([cos, cos], axis=-1).astype(jnp.float32)  # (H, dk) = [cos, cos]
    sin_signed = jnp.concatenate([sin, -sin], axis=-1).astype(jnp.float32)

    params = dict(wqkv=wqkv, wo=wo, w1=w1, w2=w2, g1=g1, g2=g2,
                  cos=cos_full, sin=sin_signed)

    out = transformer_block(x, params, n_heads=H)
    out = jax.block_until_ready(out)

    ref = reference_block(x, params, n_heads=H)
    assert out.shape == (B, T, D) and out.dtype == jnp.float32
    err = float(jnp.max(jnp.abs(out - ref)))
    # bf16 MXU operands + approx reciprocal -> compare against the f32 reference loosely
    assert jnp.allclose(out, ref, rtol=2e-2, atol=2e-2), f"max err {err}"

    print("KERNEL_OK")
</pallas_src>

<mosaic_0001>
module attributes {stable_mosaic.version = 11 : i64} {
  func.func @_rmsnorm_qkv_kernel(%arg0: i32, %arg1: memref<8x32xf32, #tpu.memory_space<vmem>>, %arg2: memref<96x32xbf16, #tpu.memory_space<vmem>>, %arg3: memref<1x32xf32, #tpu.memory_space<vmem>>, %arg4: memref<8x96xf32, #tpu.memory_space<vmem>>) attributes {dimension_semantics = [#tpu.dimension_semantics<parallel>], iteration_bounds = array<i64: 4>, scalar_prefetch = 0 : i64, scratch_operands = 0 : i64, tpu.core_type = #tpu.core_type<tc>, window_params = [{transform_indices = @transform_0, window_bounds = array<i64: 8, 32>}, {pipeline_mode = #tpu.pipeline_mode<synchronous>, transform_indices = @transform_1, window_bounds = array<i64: 96, 32>}, {pipeline_mode = #tpu.pipeline_mode<synchronous>, transform_indices = @transform_2, window_bounds = array<i64: 1, 32>}, {transform_indices = @transform_3, window_bounds = array<i64: 8, 96>}]} {
    %c0 = arith.constant 0 : index
    %c0_0 = arith.constant 0 : index
    %0 = vector.load %arg1[%c0, %c0_0] : memref<8x32xf32, #tpu.memory_space<vmem>>, vector<8x32xf32>
    %1 = arith.mulf %0, %0 : vector<8x32xf32>
    %cst = arith.constant dense<0.000000e+00> : vector<8xf32>
    %2 = vector.multi_reduction <add>, %1, %cst [1] : vector<8x32xf32> to vector<8xf32>
    %3 = vector.shape_cast %2 : vector<8xf32> to vector<8x1xf32>
    %cst_1 = arith.constant 3.200000e+01 : f32
    %4 = vector.broadcast %cst_1 : f32 to vector<8x1xf32>
    %5 = arith.divf %3, %4 : vector<8x1xf32>
    %cst_2 = arith.constant 1.1920929E-7 : f32
    %6 = vector.broadcast %cst_2 : f32 to vector<8x1xf32>
    %7 = arith.addf %5, %6 : vector<8x1xf32>
    %8 = math.rsqrt %7 : vector<8x1xf32>
    %9 = vector.broadcast %8 : vector<8x1xf32> to vector<8x32xf32>
    %10 = arith.mulf %0, %9 : vector<8x32xf32>
    %c0_3 = arith.constant 0 : index
    %c0_4 = arith.constant 0 : index
    %11 = vector.load %arg3[%c0_3, %c0_4] : memref<1x32xf32, #tpu.memory_space<vmem>>, vector<1x32xf32>
    %12 = vector.broadcast %11 : vector<1x32xf32> to vector<8x32xf32>
    %13 = arith.mulf %10, %12 : vector<8x32xf32>
    %14 = arith.truncf %13 : vector<8x32xf32> to vector<8x32xbf16>
    %c0_5 = arith.constant 0 : index
    %c0_6 = arith.constant 0 : index
    %15 = vector.load %arg2[%c0_5, %c0_6] : memref<96x32xbf16, #tpu.memory_space<vmem>>, vector<96x32xbf16>
    %cst_7 = arith.constant dense<0.000000e+00> : vector<8x96xf32>
    %16 = tpu.matmul %14, %15, %cst_7 {dimension_numbers = #tpu.dot_dimension_numbers<[1], [1], [0], [0], [0, 0, 1, 0], [], []>} : vector<8x32xbf16>, vector<96x32xbf16>, vector<8x96xf32> -> vector<8x96xf32>
    %c0_8 = arith.constant 0 : index
    %c0_9 = arith.constant 0 : index
    %17 = vector.load %arg4[%c0_8, %c0_9] : memref<8x96xf32, #tpu.memory_space<vmem>>, vector<8x96xf32>
    tpu.vector_store %arg4[%c0_8, %c0_9], %16 {strides = array<i32>} : memref<8x96xf32, #tpu.memory_space<vmem>>, vector<8x96xf32>,
    return
  }
  func.func @transform_0(%arg0: i32) -> (i32, i32) {
    %c0_i32 = arith.constant 0 : i32
    %c0_i32_0 = arith.constant 0 : i32
    return %arg0, %c0_i32 : i32, i32
  }
  func.func @transform_1(%arg0: i32) -> (i32, i32) {
    %c0_i32 = arith.constant 0 : i32
    %c0_i32_0 = arith.constant 0 : i32
    %c0_i32_1 = arith.constant 0 : i32
    return %c0_i32, %c0_i32_0 : i32, i32
  }
  func.func @transform_2(%arg0: i32) -> (i32, i32) {
    %c0_i32 = arith.constant 0 : i32
    %c0_i32_0 = arith.constant 0 : i32
    %c0_i32_1 = arith.constant 0 : i32
    return %c0_i32, %c0_i32_0 : i32, i32
  }
  func.func @transform_3(%arg0: i32) -> (i32, i32) {
    %c0_i32 = arith.constant 0 : i32
    %c0_i32_0 = arith.constant 0 : i32
    return %arg0, %c0_i32 : i32, i32
  }
}

</mosaic_0001>

<llo_original>
// kernel: tpu_custom_call.1
$region0: #{tpu_custom_call.1}
  #allocation0 [shape = 'u32[]', space=smem, size = 0x4, offset = 0x4, fixed_abs, tag = 'smem constant byte address 0x4 - core index']
  #allocation1 [shape = 'u32[144,128]{1,0:T(1,128)}', space=vmem, size = 0x12000, scoped, tag = 'internal scratch']
  %s0 = inlined_call_operand.vmem [shape: f32[32,32], index: 0, kind: input, shape index: {}]
  %s1 = inlined_call_operand.vmem [shape: bf16[96,32], index: 1, kind: input, shape index: {}]
  %s2 = inlined_call_operand.vmem [shape: f32[1,32], index: 2, kind: input, shape index: {}]
  %s3 = inlined_call_operand.hbm [shape: f32[32,96], index: 3, kind: output, shape index: {}]
  %s4 = sld [smem:[#allocation0]]
  $region45: #{tpu_custom_call.1} parent=0
    _
  %s6 = ssub.s32 1, %s4
  %s7 = scalar_select 0, %s6, %s4
  $region1: #{tpu_custom_call.1} parent=0
    #allocation2 [shape = 'u8[8192]{0}', space=vmem, size = 0x2000, scoped, tag = 'output window, operand 0']
    #allocation3 [shape = 's32[2]{0}', space=sflag, size = 0x8, scoped, tag = 'scoped memory for tpu_custom_call.1']
    %8 = vsyncpa [#allocation3], 0
    %s9 = scalar_lea.sflag [#allocation3], 1
    %10 = vsyncpa %s9, 0
    loop: start=0, step=1, limit=6
    $region2: #{tpu_custom_call.1} parent=1 // loop_pre_header
      _
    $region3: #{tpu_custom_call.1} parent=1 // loop_header
      %s12 = sphi 0, %s16
      %p13 = scmp.ge.s32.totalorder %s12, 6
      %s22 = sphi 0, %s24
      %s25 = sphi 0, %s22
      %s26 = sphi 0, %s25
      %s42 = sphi 0, %s26
      %s46 = sphi 0, %s46
      %s48 = sphi 0, %s46
      %s49 = sphi 0, %s48
      %s63 = sphi 0, %s49
      %s67 = sphi 0, %s67
      %s69 = sphi 0, %s67
      %s70 = sphi 0, %s69
      %s84 = sphi 0, %s70
      %s90 = sphi 0, %s92
      %s93 = sphi 0, %s90
      %s94 = sphi 0, %s93
      %s110 = sphi 0, %s94
    $region4: #{tpu_custom_call.1} parent=1 // loop_header_branch
      %15 = sbr.rel (%p13) target = $region8
    $region5: #{tpu_custom_call.1} parent=1 // loop_body
      %s17 = ssub.s32 %s12, 1
      %s18 = ssub.s32 %s12, 2
      %s19 = sadd.s32 %s12, 1
      %s20 = ssub.s32 %s12, %s19
      %p21 = scmp.eq.s32.totalorder %s20, 0
      %s23 = sadd.s32 %s22, 1
      %s24 = scalar_select %p21, %s22, %s23
      %p27 = pneg %p21
      %p28 = scmp.eq.s32.totalorder %s12, 3
      %p29 = por %p27, %p28
      %p30 = scmp.ne.s32.totalorder %s22, %s25
      %p31 = scmp.eq.s32.totalorder %s12, 0
      %p32 = por %p30, %p31
      %p33 = scmp.ne.s32.totalorder %s22, %s25
      %p34 = scmp.eq.s32.totalorder %s17, 3
      %p35 = por %p33, %p34
      %p36 = scmp.ne.s32.totalorder %s25, %s26
      %p37 = scmp.eq.s32.totalorder %s17, 0
      %p38 = por %p36, %p37
      %p39 = scmp.ne.s32.totalorder %s25, %s26
      %p40 = scmp.eq.s32.totalorder %s18, 3
      %p41 = por %p39, %p40
      %p43 = scmp.ne.s32.totalorder %s26, %s42
      %p44 = scmp.eq.s32.totalorder %s18, 0
      %p45 = por %p43, %p44
      %s47 = sadd.s32 %s46, 1
      %p50 = scmp.eq.s32.totalorder %s12, 3
      %p51 = scmp.ne.s32.totalorder %s46, %s48
      %p52 = scmp.eq.s32.totalorder %s12, 0
      %p53 = por %p51, %p52
      %p54 = scmp.ne.s32.totalorder %s46, %s48
      %p55 = scmp.eq.s32.totalorder %s17, 3
      %p56 = por %p54, %p55
      %p57 = scmp.ne.s32.totalorder %s48, %s49
      %p58 = scmp.eq.s32.totalorder %s17, 0
      %p59 = por %p57, %p58
      %p60 = scmp.ne.s32.totalorder %s48, %s49
      %p61 = scmp.eq.s32.totalorder %s18, 3
      %p62 = por %p60, %p61
      %p64 = scmp.ne.s32.totalorder %s49, %s63
      %p65 = scmp.eq.s32.totalorder %s18, 0
      %p66 = por %p64, %p65
      %s68 = sadd.s32 %s67, 1
      %p71 = scmp.eq.s32.totalorder %s12, 3
      %p72 = scmp.ne.s32.totalorder %s67, %s69
      %p73 = scmp.eq.s32.totalorder %s12, 0
      %p74 = por %p72, %p73
      %p75 = scmp.ne.s32.totalorder %s67, %s69
      %p76 = scmp.eq.s32.totalorder %s17, 3
      %p77 = por %p75, %p76
      %p78 = scmp.ne.s32.totalorder %s69, %s70
      %p79 = scmp.eq.s32.totalorder %s17, 0
      %p80 = por %p78, %p79
      %p81 = scmp.ne.s32.totalorder %s69, %s70
      %p82 = scmp.eq.s32.totalorder %s18, 3
      %p83 = por %p81, %p82
      %p85 = scmp.ne.s32.totalorder %s70, %s84
      %p86 = scmp.eq.s32.totalorder %s18, 0
      %p87 = por %p85, %p86
      %s88 = ssub.s32 %s12, %s19
      %p89 = scmp.eq.s32.totalorder %s88, 0
      %s91 = sadd.s32 %s90, 1
      %s92 = scalar_select %p89, %s90, %s91
      %p95 = pneg %p89
      %p96 = scmp.eq.s32.totalorder %s12, 3
      %p97 = por %p95, %p96
      %p98 = scmp.ne.s32.totalorder %s90, %s93
      %p99 = scmp.eq.s32.totalorder %s12, 0
      %p100 = por %p98, %p99
      %p101 = scmp.ne.s32.totalorder %s90, %s93
      %p102 = scmp.eq.s32.totalorder %s17, 3
      %p103 = por %p101, %p102
      %p104 = scmp.ne.s32.totalorder %s93, %s94
      %p105 = scmp.eq.s32.totalorder %s17, 0
      %p106 = por %p104, %p105
      %p107 = scmp.ne.s32.totalorder %s93, %s94
      %p108 = scmp.eq.s32.totalorder %s18, 3
      %p109 = por %p107, %p108
      %p111 = scmp.ne.s32.totalorder %s94, %s110
      %p112 = scmp.eq.s32.totalorder %s18, 0
      %p113 = por %p111, %p112
      %p114 = scmp.le.s32.totalorder 1, %s12
      %p115 = scmp.lt.s32.totalorder %s12, 5
      %p116 = pnand %p114, %p115
      %p117 = pneg %p116
      // Predicated region
      $region9: #{tpu_custom_call.1} parent=5 // pred_check
        _
      $region10: #{tpu_custom_call.1} parent=5 // pred_check_branch
        %119 = sbr.rel (%p116) target = $region12
      $region11: #{tpu_custom_call.1} parent=5 // pred_region
        %s120 = ssub.s32 %s12, 1
        // Predicated region
        $region13: #{tpu_custom_call.1} parent=11 // pred_check
          %p121 = pneg %p59
        $region14: #{tpu_custom_call.1} parent=11 // pred_check_branch
          %123 = sbr.rel (%p121) target = $region16
        $region15: #{tpu_custom_call.1} parent=11 // pred_region
          _
        $region16: #{tpu_custom_call.1} parent=11 // pred_fallthru
          _
        // Predicated region
        $region17: #{tpu_custom_call.1} parent=11 // pred_check
          %p124 = pneg %p80
        $region18: #{tpu_custom_call.1} parent=11 // pred_check_branch
          %126 = sbr.rel (%p124) target = $region20
        $region19: #{tpu_custom_call.1} parent=11 // pred_region
          _
        $region20: #{tpu_custom_call.1} parent=11 // pred_fallthru
          _
      $region12: #{tpu_custom_call.1} parent=5 // pred_fallthru
        _
      %p127 = scmp.lt.s32.totalorder %s12, 4
      // Predicated region
      $region21: #{tpu_custom_call.1} parent=5 // pred_check
        %p128 = pneg %p127
      $region22: #{tpu_custom_call.1} parent=5 // pred_check_branch
        %130 = sbr.rel (%p128) target = $region24
      $region23: #{tpu_custom_call.1} parent=5 // pred_region
        // Predicated region
        $region25: #{tpu_custom_call.1} parent=23 // pred_check
          %p131 = pneg %p32
        $region26: #{tpu_custom_call.1} parent=23 // pred_check_branch
          %133 = sbr.rel (%p131) target = $region28
        $region27: #{tpu_custom_call.1} parent=23 // pred_region
          %p134 = scmp.lt.s32.totalorder %s12, 3
          %s135 = scalar_select %p134, %s12, 3
          %s136 = smul.addr %s135, 8
          %s137 = scalar_lea.vmem %s0, %s136
        $region28: #{tpu_custom_call.1} parent=23 // pred_fallthru
          _
      $region24: #{tpu_custom_call.1} parent=5 // pred_fallthru
        _
      %p138 = scmp.le.s32.totalorder 1, %s12
      %p139 = scmp.lt.s32.totalorder %s12, 5
      %p140 = pnand %p138, %p139
      %p141 = pneg %p140
      // Predicated region
      $region29: #{tpu_custom_call.1} parent=5 // pred_check
        _
      $region30: #{tpu_custom_call.1} parent=5 // pred_check_branch
        %143 = sbr.rel (%p140) target = $region32
      $region31: #{tpu_custom_call.1} parent=5 // pred_region
        %s144 = ssub.s32 %s12, 1
        %p145 = scmp.lt.s32.totalorder %s17, 3
        %s146 = scalar_select %p145, %s17, 3
        %s147 = smul.addr %s146, 8
        %s148 = scalar_lea.vmem %s0, %s147
        %p149 = pneg %p38
        %p150 = pneg %p35
        %p151 = pneg %p59
        %p152 = pneg %p56
        %p153 = pneg %p80
        %p154 = pneg %p77
        %p155 = pneg %p106
        %p156 = pneg %p103
        %s157 = sand.u32 %s93, 1
        %s158 = scalar_lea.sflag [#allocation3], %s157
        %s159 = sand.u32 %s93, 1
        %s160 = smul.addr %s159, 8
        %s161 = scalar_lea.vmem [#allocation2], %s160
        %p162 = scmp.lt.s32.totalorder %s17, 3
        %s163 = scalar_select %p162, %s17, 3
        %s164 = smul.addr %s163, 8
        %s165 = scalar_lea.vmem %s0, %s164
        %v167 = vld [vmem:[%s165] sm:$0xff]
        %v168 = vmul.f32 %v167, %v167
        %vm169 = vcmask 261120
        %v170 = vsel %vm169, %v168, 0.0
        %171 = vadd.xlane.f32.xlu0 %v170
        %v172 = vpop.xlane.xlu0 %171
        %v173 = vrcp.pop 32.0
        %v174 = vmul.f32 %v172, %v173
        %v175 = vadd.f32 %v174, 1.1920929e-07
        %v176 = vrsqrt.pop %v175
        %v177 = vmul.f32 %v167, %v176
        %v178 = vld [vmem:[%s2] sm:$0x1]
        %v180 = vlaneseq
        %v181 = vshrl.u32 %v180, 7
        %v182 = vsub.s32 0, %v181
        %v183 = vrot.slane %v178, %v182
        %v185 = vmul.f32 %v177, %v183
        %v186 = vpack.c.bf16 %v185, %v185
        %v187 = vld [vmem:[%s1] sm:$0xf]
        %v188 = vld [vmem:[%s1 + $0x4] sm:$0xf]
        %v189 = vld [vmem:[%s1 + $0x8] sm:$0xf]
        %v190 = vld [vmem:[%s1 + $0xc] sm:$0xf]
        %v191 = vld [vmem:[%s1 + $0x10] sm:$0xf]
        %v192 = vld [vmem:[%s1 + $0x14] sm:$0xf]
        %v193 = vld [vmem:[%s1 + $0x18] sm:$0xf]
        %v194 = vld [vmem:[%s1 + $0x1c] sm:$0xf]
        %v195 = vld [vmem:[%s1 + $0x20] sm:$0xf]
        %v196 = vld [vmem:[%s1 + $0x24] sm:$0xf]
        %v197 = vld [vmem:[%s1 + $0x28] sm:$0xf]
        %v198 = vld [vmem:[%s1 + $0x2c] sm:$0xf]
        %v211 = vunpack.c.l.b16 %v187
        %v212 = vunpack.c.l.b16 %v188
        %v213 = vunpack.c.l.b16 %v189
        %v214 = vunpack.c.l.b16 %v190
        %v215 = vunpack.c.l.b16 %v191
        %v216 = vunpack.c.l.b16 %v192
        %v217 = vunpack.c.l.b16 %v193
        %v218 = vunpack.c.l.b16 %v194
        %v219 = vunpack.c.l.b16 %v195
        %v220 = vunpack.c.l.b16 %v196
        %v221 = vunpack.c.l.b16 %v197
        %v222 = vunpack.c.l.b16 %v198
        %v223 = vpack.c.b16 %v212, %v211
        %v224 = vpack.c.b16 %v214, %v213
        %v225 = vpack.c.b16 %v216, %v215
        %v226 = vpack.c.b16 %v218, %v217
        %v227 = vpack.c.b16 %v220, %v219
        %v228 = vpack.c.b16 %v222, %v221
        %v230 = vsel %vm169, %v186, 0
        %v233 = vsel %vm169, %v223, 0
        %v236 = vsel %vm169, %v224, 0
        %v239 = vsel %vm169, %v225, 0
        %v242 = vsel %vm169, %v226, 0
        %v245 = vsel %vm169, %v227, 0
        %v248 = vsel %vm169, %v228, 0
        %250 = vmatprep.subr.bf16.mxu0 0
        %251 = vmatpush1.bf16.xpose.msra.mxu0 %v233
        %252 = vmatprep.subr.bf16.mxu0 0
        %253 = vmatpush1.bf16.xpose.msra.mxu0 %v236
        %254 = vmatprep.subr.bf16.mxu0 0
        %255 = vmatpush1.bf16.xpose.msra.mxu0 %v239
        %256 = vmatprep.subr.bf16.mxu0 0
        %257 = vmatpush1.bf16.xpose.msra.mxu0 %v242
        %258 = vmatprep.subr.bf16.mxu0 0
        %259 = vmatpush1.bf16.xpose.msra.mxu0 %v245
        %260 = vmatprep.subr.bf16.mxu0 0
        %261 = vmatpush1.bf16.xpose.msra.mxu0 %v248
        %262 = vmatprep.subr.bf16.mxu0 0
        %263 = vmatpush1.bf16.xpose.msra.mxu0 0
        %264 = vmatprep.subr.bf16.mxu0 0
        %265 = vmatpush1.bf16.xpose.msra.mxu0 0
        %266 = vmatprep.subr.bf16.mxu0 0
        %267 = vmatpush1.bf16.xpose.msra.mxu0 0
        %268 = vmatprep.subr.bf16.mxu0 0
        %269 = vmatpush1.bf16.xpose.msra.mxu0 0
        %270 = vmatprep.subr.bf16.mxu0 0
        %271 = vmatpush1.bf16.xpose.msra.mxu0 0
        %272 = vmatprep.subr.bf16.mxu0 0
        %273 = vmatpush1.bf16.xpose.msra.mxu0 0
        %274 = vmatprep.subr.bf16.mxu0 0
        %275 = vmatpush1.bf16.xpose.msra.mxu0 0
        %276 = vmatprep.subr.bf16.mxu0 0
        %277 = vmatpush1.bf16.xpose.msra.mxu0 0
        %278 = vmatprep.subr.bf16.mxu0 0
        %279 = vmatpush1.bf16.xpose.msra.mxu0 0
        %280 = vmatprep.subr.bf16.mxu0 0
        %281 = vmatpush1.bf16.xpose.msra.mxu0 0
        %282 = vmatprep.mubr.bf16.mxu0 0
        %283 = vmatmul.mubr.bf16.gmra.mrb[0].mxu0 %v230
        %v284 = vpop.f32.mrb[0].mxu0
        %v285 = vadd.f32 0.0, %v284
        %v286 = vpop.f32.mrb[0].mxu0
        %v287 = vpop.f32.mrb[0].mxu0
        %v288 = vpop.f32.mrb[0].mxu0
        %289 = vdwg.mxu0
        %vm290 = vcmask 785408
        %291 = vst.msk [vmem:[%s161] sm:$0xff] %vm290, %v285
        %s292 = sand.u32 %s93, 1
        %s293 = scalar_lea.sflag [#allocation3], %s292
        %s294 = sand.u32 %s93, 1
        %s295 = smul.addr %s294, 8
        %s296 = scalar_lea.vmem [#allocation2], %s295
        // Predicated region
        $region33: #{tpu_custom_call.1} parent=31 // pred_check
          %p297 = pneg %p103
        $region34: #{tpu_custom_call.1} parent=31 // pred_check_branch
          %299 = sbr.rel (%p297) target = $region36
        $region35: #{tpu_custom_call.1} parent=31 // pred_region
          %s301 = ssub.s32 128, 128
          %302 = vsyncadd %s293, %s301
          %s303 = smul.addr %s17, 128
          %s304 = scalar_lea.hbm %s3, %s303
          %s306 = sshll.u32 %s296, 4
          %s307 = int_to_ptr.vmem [resolvable:$true] %s306
          %309 = dma.vmem_to_hbm [thread:$0]  %s307, 128, %s304, %s293
        $region36: #{tpu_custom_call.1} parent=31 // pred_fallthru
          _
      $region32: #{tpu_custom_call.1} parent=5 // pred_fallthru
        _
      %p310 = scmp.le.s32.totalorder 2, %s12
      // Predicated region
      $region37: #{tpu_custom_call.1} parent=5 // pred_check
        %p311 = pneg %p310
      $region38: #{tpu_custom_call.1} parent=5 // pred_check_branch
        %313 = sbr.rel (%p311) target = $region40
      $region39: #{tpu_custom_call.1} parent=5 // pred_region
        %s314 = ssub.s32 %s12, 2
        // Predicated region
        $region41: #{tpu_custom_call.1} parent=39 // pred_check
          %p315 = pneg %p109
        $region42: #{tpu_custom_call.1} parent=39 // pred_check_branch
          %317 = sbr.rel (%p315) target = $region44
        $region43: #{tpu_custom_call.1} parent=39 // pred_region
          %s318 = sand.u32 %s94, 1
          %s319 = scalar_lea.sflag [#allocation3], %s318
          %s320 = sand.u32 %s94, 1
          %s321 = smul.addr %s320, 8
          %s322 = scalar_lea.vmem [#allocation2], %s321
          %323 = dma.done %s319, 128
        $region44: #{tpu_custom_call.1} parent=39 // pred_fallthru
          _
      $region40: #{tpu_custom_call.1} parent=5 // pred_fallthru
        _
    $region6: #{tpu_custom_call.1} parent=1 // loop_footer
      %s16 = sadd.s32 1, %s12
    $region7: #{tpu_custom_call.1} parent=1 // loop_footer_branch
      %11 = sbr.rel target = $region3
    $region8: #{tpu_custom_call.1} parent=1 // loop_exit
      _
    %324 = vsyncpa [#allocation3], 1
    %s325 = scalar_lea.sflag [#allocation3], 1
    %326 = vsyncpa %s325, 1

</llo_original>
